<compile_context>
chip_gen: v7x
topology: tpu7x:2x2x1
jax: 0.10.0
libtpu: 0.0.40
codegen_flags: <defaults>
</compile_context>

<pallas_src>
import jax
import jax.numpy as jnp
from jax import lax
from jax.experimental import pallas as pl
from jax.experimental.pallas import tpu as pltpu


LN_EPS = 1e-5   # torch.nn.LayerNorm default
_LANE = 128


def _round_up(n, m):
    return (n + m - 1) // m * m


# ----------------------------------------------------------------------------- kernel
def _make_kernel(bias_offsets, bias_widths):
    """Kernel factory closing over static offsets into the packed bias slab."""
    (o_b1, o_g, o_be, o_b2, o_b3, o_b4, o_b5, o_b6) = bias_offsets
    (n_b1, n_g, n_be, n_b2, n_b3, n_b4, n_b5, n_b6) = bias_widths

    def kernel(x_ref,
               w1_ref, w2_ref, w3_ref, w4_ref, w5_ref, w6_ref,
               bias_ref,
               z_ref, xr_ref):
        def bias(off, width):
            # Static, lane-aligned slice of the resident (1, total) f32 slab.
            return bias_ref[:, off:off + width]

        x = x_ref[...].astype(jnp.bfloat16)

        # ---- encoder ----
        # Linear(input_dim, 256)
        h = jnp.dot(x, w1_ref[...], preferred_element_type=jnp.float32) + bias(o_b1, n_b1)
        # LayerNorm(256): two-pass (numerically stable) biased variance, matches PyTorch.
        mu = jnp.mean(h, axis=-1, keepdims=True)
        c = h - mu
        var = jnp.mean(c * c, axis=-1, keepdims=True)
        h = c * lax.rsqrt(var + LN_EPS) * bias(o_g, n_g) + bias(o_be, n_be)
        # ReLU; Dropout(0.3) is identity at inference time.
        h = jnp.maximum(h, 0.0).astype(jnp.bfloat16)
        # Linear(256, 128) + ReLU
        h = jnp.dot(h, w2_ref[...], preferred_element_type=jnp.float32) + bias(o_b2, n_b2)
        h = jnp.maximum(h, 0.0).astype(jnp.bfloat16)
        # Linear(128, latent_dim)
        z = jnp.dot(h, w3_ref[...], preferred_element_type=jnp.float32) + bias(o_b3, n_b3)
        z_ref[...] = z.astype(z_ref.dtype)

        # ---- decoder ----
        # Linear(latent_dim, 128) + ReLU
        d = jnp.dot(z.astype(jnp.bfloat16), w4_ref[...],
                    preferred_element_type=jnp.float32) + bias(o_b4, n_b4)
        d = jnp.maximum(d, 0.0).astype(jnp.bfloat16)
        # Linear(128, 256) + ReLU
        d = jnp.dot(d, w5_ref[...], preferred_element_type=jnp.float32) + bias(o_b5, n_b5)
        d = jnp.maximum(d, 0.0).astype(jnp.bfloat16)
        # Linear(256, input_dim)
        xr = jnp.dot(d, w6_ref[...], preferred_element_type=jnp.float32) + bias(o_b6, n_b6)
        xr_ref[...] = xr.astype(xr_ref.dtype)

    return kernel


# ----------------------------------------------------------------------------- packing
def pack_params(params):
    """One-time parameter packing (hoisted out of the per-call path).

    Weights are cast to bf16; the eight bias/LN vectors are packed into a single
    resident f32 slab with lane-aligned (multiple-of-128) segment offsets.
    """
    input_dim = int(params["w1"].shape[0])
    latent_dim = int(params["w3"].shape[1])

    weights = tuple(params[k].astype(jnp.bfloat16)
                    for k in ("w1", "w2", "w3", "w4", "w5", "w6"))

    vec_names = ("b1", "gamma", "beta", "b2", "b3", "b4", "b5", "b6")
    vecs = [params[k].astype(jnp.float32) for k in vec_names]
    widths = tuple(int(v.shape[0]) for v in vecs)

    offsets, off = [], 0
    for w in widths:
        offsets.append(off)
        off += _round_up(w, _LANE)
    total = off

    slab = jnp.zeros((1, total), jnp.float32)
    for v, o in zip(vecs, offsets):
        slab = lax.dynamic_update_slice(slab, v.reshape(1, -1), (0, o))

    return dict(weights=weights, bias_slab=slab,
                bias_offsets=tuple(offsets), bias_widths=widths,
                input_dim=input_dim, latent_dim=latent_dim)


# ----------------------------------------------------------------------------- forward
def feature_autoencoder_forward(x, packed, *, batch_tile=1024):
    """x: [B, input_dim] (f32 or bf16; bf16 recommended — kernel is HBM-bound).

    Returns (z [B, latent_dim], x_rec [B, input_dim]) in bfloat16.
    """
    B, input_dim = x.shape
    assert input_dim == packed["input_dim"]
    latent_dim = packed["latent_dim"]
    w1, w2, w3, w4, w5, w6 = packed["weights"]
    bias_slab = packed["bias_slab"]

    # --- batch tiling ---
    if B <= 16:
        tile = B                                      # single full-extent block
    else:
        tile = min(batch_tile, B)
        # v7x has 2 TensorCores: keep >= 2 grid blocks so "parallel" can shard them.
        tile = min(tile, _round_up(pl.cdiv(B, 2), 16))
        if tile >= 512:
            tile = (tile // 256) * 256                # MXU-height / lane-friendly
        else:
            tile = max(16, (tile // 16) * 16)         # bf16 sublane packing
    grid = (pl.cdiv(B, tile),)
    # NOTE: a trailing partial block reads out-of-bounds rows of x; all math is
    # row-wise and the out-of-bounds output rows are clipped by the writeback DMA,
    # so results are exact.

    # --- advisory cost estimate ---
    flops = 2 * B * (input_dim * 256 + 256 * 128 + 128 * latent_dim
                     + latent_dim * 128 + 128 * 256 + 256 * input_dim)
    wt_bytes = sum(int(w.size) * 2 for w in (w1, w2, w3, w4, w5, w6)) \
        + int(bias_slab.size) * 4
    bytes_accessed = int(B * input_dim * x.dtype.itemsize + wt_bytes
                         + B * (latent_dim + input_dim) * 2)
    cost = pl.CostEstimate(flops=int(flops), transcendentals=int(B),
                           bytes_accessed=bytes_accessed)

    # --- VMEM budget: 2x estimate, capped well below v7x's 64 MiB physical VMEM ---
    io_bytes = 2 * tile * (input_dim * x.dtype.itemsize
                           + (latent_dim + input_dim) * 2)     # double-buffered I/O
    act_bytes = 8 * tile * max(256, _round_up(input_dim, _LANE),
                               _round_up(latent_dim, _LANE)) * 4
    est = io_bytes + 2 * wt_bytes + act_bytes
    vmem_limit = int(min(48 * 2 ** 20, max(16 * 2 ** 20, 2 * est)))

    in_specs = [pl.BlockSpec((tile, input_dim), lambda i: (i, 0))]
    for w in (w1, w2, w3, w4, w5, w6):
        in_specs.append(pl.BlockSpec(w.shape, lambda i: (0, 0)))   # resident weights
    in_specs.append(pl.BlockSpec(bias_slab.shape, lambda i: (0, 0)))

    out_specs = [
        pl.BlockSpec((tile, latent_dim), lambda i: (i, 0)),
        pl.BlockSpec((tile, input_dim), lambda i: (i, 0)),
    ]
    out_shape = (
        jax.ShapeDtypeStruct((B, latent_dim), jnp.bfloat16),
        jax.ShapeDtypeStruct((B, input_dim), jnp.bfloat16),
    )

    kernel = _make_kernel(packed["bias_offsets"], packed["bias_widths"])

    z, xr = pl.pallas_call(
        kernel,
        grid_spec=pltpu.PrefetchScalarGridSpec(
            num_scalar_prefetch=0,
            grid=grid,
            in_specs=in_specs,
            out_specs=out_specs,
        ),
        out_shape=out_shape,
        compiler_params=pltpu.CompilerParams(
            dimension_semantics=("parallel",),
            vmem_limit_bytes=vmem_limit,
        ),
        cost_estimate=cost,
    )(x, w1, w2, w3, w4, w5, w6, bias_slab)

    return z, xr


# ----------------------------------------------------------------------------- test utils
def init_params(key, input_dim, latent_dim=64):
    """Deterministic synthetic parameters with the same shapes as the PyTorch module
    (weights stored transposed: [in, out])."""
    dims = [
        ("w1", (input_dim, 256)), ("b1", (256,)),
        ("gamma", (256,)), ("beta", (256,)),
        ("w2", (256, 128)), ("b2", (128,)),
        ("w3", (128, latent_dim)), ("b3", (latent_dim,)),
        ("w4", (latent_dim, 128)), ("b4", (128,)),
        ("w5", (128, 256)), ("b5", (256,)),
        ("w6", (256, input_dim)), ("b6", (input_dim,)),
    ]
    params = {}
    keys = jax.random.split(key, len(dims))
    for k, (name, shape) in zip(keys, dims):
        if name == "gamma":
            params[name] = jnp.ones(shape, jnp.float32)
        elif name == "beta":
            params[name] = jnp.zeros(shape, jnp.float32)
        elif name.startswith("b"):
            params[name] = 0.01 * jax.random.normal(k, shape, jnp.float32)
        else:
            fan_in = shape[0]
            params[name] = jax.random.normal(k, shape, jnp.float32) / jnp.sqrt(
                jnp.float32(fan_in))
    return params


def reference_forward(x, params):
    """Plain-JAX reference mirroring the PyTorch forward (eval mode), with the same
    bf16-matmul / f32-accumulation numerics as the kernel."""
    bf16 = jnp.bfloat16

    def mm(a, w):
        return jnp.dot(a.astype(bf16), w.astype(bf16),
                       preferred_element_type=jnp.float32)

    h = mm(x, params["w1"]) + params["b1"]
    mu = h.mean(-1, keepdims=True)
    var = ((h - mu) ** 2).mean(-1, keepdims=True)
    h = (h - mu) / jnp.sqrt(var + LN_EPS) * params["gamma"] + params["beta"]
    h = jnp.maximum(h, 0.0)                               # Dropout(0.3): identity (eval)
    h = jnp.maximum(mm(h, params["w2"]) + params["b2"], 0.0)
    z = mm(h, params["w3"]) + params["b3"]
    d = jnp.maximum(mm(z, params["w4"]) + params["b4"], 0.0)
    d = jnp.maximum(mm(d, params["w5"]) + params["b5"], 0.0)
    xr = mm(d, params["w6"]) + params["b6"]
    return z, xr


if __name__ == "__main__":
    key = jax.random.PRNGKey(0)
    k_x, k_p = jax.random.split(key)

    batch, input_dim, latent_dim = 32, 32, 64
    x = jax.random.normal(k_x, (batch, input_dim), jnp.float32)
    params = init_params(k_p, input_dim, latent_dim)

    packed = pack_params(params)          # one-time packing, outside the forward path
    x_bf = x.astype(jnp.bfloat16)         # bf16 I/O streaming (kernel is HBM-bound)

    z, x_rec = feature_autoencoder_forward(x_bf, packed)
    jax.block_until_ready((z, x_rec))

    z_ref, xr_ref = reference_forward(x, params)
    assert z.shape == (batch, latent_dim) and x_rec.shape == (batch, input_dim)
    assert jnp.allclose(z.astype(jnp.float32), z_ref, atol=3e-2, rtol=3e-2), \
        "latent mismatch"
    assert jnp.allclose(x_rec.astype(jnp.float32), xr_ref, atol=3e-2, rtol=3e-2), \
        "reconstruction mismatch"

    print("KERNEL_OK")
</pallas_src>

<mosaic_0001>
module attributes {stable_mosaic.version = 11 : i64} {
  func.func @kernel(%arg0: i32, %arg1: memref<16x32xbf16, #tpu.memory_space<vmem>>, %arg2: memref<32x256xbf16, #tpu.memory_space<vmem>>, %arg3: memref<256x128xbf16, #tpu.memory_space<vmem>>, %arg4: memref<128x64xbf16, #tpu.memory_space<vmem>>, %arg5: memref<64x128xbf16, #tpu.memory_space<vmem>>, %arg6: memref<128x256xbf16, #tpu.memory_space<vmem>>, %arg7: memref<256x32xbf16, #tpu.memory_space<vmem>>, %arg8: memref<1x1536xf32, #tpu.memory_space<vmem>>, %arg9: memref<16x64xbf16, #tpu.memory_space<vmem>>, %arg10: memref<16x32xbf16, #tpu.memory_space<vmem>>) attributes {dimension_semantics = [#tpu.dimension_semantics<parallel>], iteration_bounds = array<i64: 2>, scalar_prefetch = 0 : i64, scratch_operands = 0 : i64, tpu.core_type = #tpu.core_type<tc>, window_params = [{transform_indices = @transform_0, window_bounds = array<i64: 16, 32>}, {pipeline_mode = #tpu.pipeline_mode<synchronous>, transform_indices = @transform_1, window_bounds = array<i64: 32, 256>}, {pipeline_mode = #tpu.pipeline_mode<synchronous>, transform_indices = @transform_2, window_bounds = array<i64: 256, 128>}, {pipeline_mode = #tpu.pipeline_mode<synchronous>, transform_indices = @transform_3, window_bounds = array<i64: 128, 64>}, {pipeline_mode = #tpu.pipeline_mode<synchronous>, transform_indices = @transform_4, window_bounds = array<i64: 64, 128>}, {pipeline_mode = #tpu.pipeline_mode<synchronous>, transform_indices = @transform_5, window_bounds = array<i64: 128, 256>}, {pipeline_mode = #tpu.pipeline_mode<synchronous>, transform_indices = @transform_6, window_bounds = array<i64: 256, 32>}, {pipeline_mode = #tpu.pipeline_mode<synchronous>, transform_indices = @transform_7, window_bounds = array<i64: 1, 1536>}, {transform_indices = @transform_8, window_bounds = array<i64: 16, 64>}, {transform_indices = @transform_9, window_bounds = array<i64: 16, 32>}]} {
    %c0 = arith.constant 0 : index
    %c0_0 = arith.constant 0 : index
    %0 = vector.load %arg1[%c0, %c0_0] : memref<16x32xbf16, #tpu.memory_space<vmem>>, vector<16x32xbf16>
    %c0_1 = arith.constant 0 : index
    %c0_2 = arith.constant 0 : index
    %1 = vector.load %arg2[%c0_1, %c0_2] : memref<32x256xbf16, #tpu.memory_space<vmem>>, vector<32x256xbf16>
    %cst = arith.constant dense<0.000000e+00> : vector<16x256xf32>
    %2 = tpu.matmul %0, %1, %cst {dimension_numbers = #tpu.dot_dimension_numbers<[1], [0], [0], [1], [0, 0, 1, 1], [], []>} : vector<16x32xbf16>, vector<32x256xbf16>, vector<16x256xf32> -> vector<16x256xf32>
    %c0_3 = arith.constant 0 : index
    %c0_4 = arith.constant 0 : index
    %3 = vector.load %arg8[%c0_3, %c0_4] : memref<1x1536xf32, #tpu.memory_space<vmem>>, vector<1x256xf32>
    %4 = vector.broadcast %3 : vector<1x256xf32> to vector<16x256xf32>
    %5 = arith.addf %2, %4 : vector<16x256xf32>
    %cst_5 = arith.constant dense<0.000000e+00> : vector<16xf32>
    %6 = vector.multi_reduction <add>, %5, %cst_5 [1] : vector<16x256xf32> to vector<16xf32>
    %7 = vector.shape_cast %6 : vector<16xf32> to vector<16x1xf32>
    %cst_6 = arith.constant 2.560000e+02 : f32
    %8 = vector.broadcast %cst_6 : f32 to vector<16x1xf32>
    %9 = arith.divf %7, %8 : vector<16x1xf32>
    %10 = vector.broadcast %9 : vector<16x1xf32> to vector<16x256xf32>
    %11 = arith.subf %5, %10 : vector<16x256xf32>
    %12 = arith.mulf %11, %11 : vector<16x256xf32>
    %cst_7 = arith.constant dense<0.000000e+00> : vector<16xf32>
    %13 = vector.multi_reduction <add>, %12, %cst_7 [1] : vector<16x256xf32> to vector<16xf32>
    %14 = vector.shape_cast %13 : vector<16xf32> to vector<16x1xf32>
    %cst_8 = arith.constant 2.560000e+02 : f32
    %15 = vector.broadcast %cst_8 : f32 to vector<16x1xf32>
    %16 = arith.divf %14, %15 : vector<16x1xf32>
    %cst_9 = arith.constant 9.99999974E-6 : f32
    %17 = vector.broadcast %cst_9 : f32 to vector<16x1xf32>
    %18 = arith.addf %16, %17 : vector<16x1xf32>
    %19 = math.rsqrt %18 : vector<16x1xf32>
    %20 = vector.broadcast %19 : vector<16x1xf32> to vector<16x256xf32>
    %21 = arith.mulf %11, %20 : vector<16x256xf32>
    %c0_10 = arith.constant 0 : index
    %c256 = arith.constant 256 : index
    %22 = vector.load %arg8[%c0_10, %c256] : memref<1x1536xf32, #tpu.memory_space<vmem>>, vector<1x256xf32>
    %23 = vector.broadcast %22 : vector<1x256xf32> to vector<16x256xf32>
    %24 = arith.mulf %21, %23 : vector<16x256xf32>
    %c0_11 = arith.constant 0 : index
    %c512 = arith.constant 512 : index
    %25 = vector.load %arg8[%c0_11, %c512] : memref<1x1536xf32, #tpu.memory_space<vmem>>, vector<1x256xf32>
    %26 = vector.broadcast %25 : vector<1x256xf32> to vector<16x256xf32>
    %27 = arith.addf %24, %26 : vector<16x256xf32>
    %cst_12 = arith.constant 0.000000e+00 : f32
    %28 = vector.broadcast %cst_12 : f32 to vector<16x256xf32>
    %29 = arith.maximumf %27, %28 : vector<16x256xf32>
    %30 = arith.truncf %29 : vector<16x256xf32> to vector<16x256xbf16>
    %c0_13 = arith.constant 0 : index
    %c0_14 = arith.constant 0 : index
    %31 = vector.load %arg3[%c0_13, %c0_14] : memref<256x128xbf16, #tpu.memory_space<vmem>>, vector<256x128xbf16>
    %cst_15 = arith.constant dense<0.000000e+00> : vector<16x128xf32>
    %32 = tpu.matmul %30, %31, %cst_15 {dimension_numbers = #tpu.dot_dimension_numbers<[1], [0], [0], [1], [0, 0, 1, 1], [], []>} : vector<16x256xbf16>, vector<256x128xbf16>, vector<16x128xf32> -> vector<16x128xf32>
    %c0_16 = arith.constant 0 : index
    %c768 = arith.constant 768 : index
    %33 = vector.load %arg8[%c0_16, %c768] : memref<1x1536xf32, #tpu.memory_space<vmem>>, vector<1x128xf32>
    %34 = vector.broadcast %33 : vector<1x128xf32> to vector<16x128xf32>
    %35 = arith.addf %32, %34 : vector<16x128xf32>
    %cst_17 = arith.constant 0.000000e+00 : f32
    %36 = vector.broadcast %cst_17 : f32 to vector<16x128xf32>
    %37 = arith.maximumf %35, %36 : vector<16x128xf32>
    %38 = arith.truncf %37 : vector<16x128xf32> to vector<16x128xbf16>
    %c0_18 = arith.constant 0 : index
    %c0_19 = arith.constant 0 : index
    %39 = vector.load %arg4[%c0_18, %c0_19] : memref<128x64xbf16, #tpu.memory_space<vmem>>, vector<128x64xbf16>
    %cst_20 = arith.constant dense<0.000000e+00> : vector<16x64xf32>
    %40 = tpu.matmul %38, %39, %cst_20 {dimension_numbers = #tpu.dot_dimension_numbers<[1], [0], [0], [1], [0, 0, 1, 1], [], []>} : vector<16x128xbf16>, vector<128x64xbf16>, vector<16x64xf32> -> vector<16x64xf32>
    %c0_21 = arith.constant 0 : index
    %c896 = arith.constant 896 : index
    %41 = vector.load %arg8[%c0_21, %c896] : memref<1x1536xf32, #tpu.memory_space<vmem>>, vector<1x64xf32>
    %42 = vector.broadcast %41 : vector<1x64xf32> to vector<16x64xf32>
    %43 = arith.addf %40, %42 : vector<16x64xf32>
    %44 = arith.truncf %43 : vector<16x64xf32> to vector<16x64xbf16>
    %c0_22 = arith.constant 0 : index
    %c0_23 = arith.constant 0 : index
    %45 = vector.load %arg9[%c0_22, %c0_23] : memref<16x64xbf16, #tpu.memory_space<vmem>>, vector<16x64xbf16>
    tpu.vector_store %arg9[%c0_22, %c0_23], %44 {strides = array<i32>} : memref<16x64xbf16, #tpu.memory_space<vmem>>, vector<16x64xbf16>,
    %46 = arith.truncf %43 : vector<16x64xf32> to vector<16x64xbf16>
    %c0_24 = arith.constant 0 : index
    %c0_25 = arith.constant 0 : index
    %47 = vector.load %arg5[%c0_24, %c0_25] : memref<64x128xbf16, #tpu.memory_space<vmem>>, vector<64x128xbf16>
    %cst_26 = arith.constant dense<0.000000e+00> : vector<16x128xf32>
    %48 = tpu.matmul %46, %47, %cst_26 {dimension_numbers = #tpu.dot_dimension_numbers<[1], [0], [0], [1], [0, 0, 1, 1], [], []>} : vector<16x64xbf16>, vector<64x128xbf16>, vector<16x128xf32> -> vector<16x128xf32>
    %c0_27 = arith.constant 0 : index
    %c1024 = arith.constant 1024 : index
    %49 = vector.load %arg8[%c0_27, %c1024] : memref<1x1536xf32, #tpu.memory_space<vmem>>, vector<1x128xf32>
    %50 = vector.broadcast %49 : vector<1x128xf32> to vector<16x128xf32>
    %51 = arith.addf %48, %50 : vector<16x128xf32>
    %cst_28 = arith.constant 0.000000e+00 : f32
    %52 = vector.broadcast %cst_28 : f32 to vector<16x128xf32>
    %53 = arith.maximumf %51, %52 : vector<16x128xf32>
    %54 = arith.truncf %53 : vector<16x128xf32> to vector<16x128xbf16>
    %c0_29 = arith.constant 0 : index
    %c0_30 = arith.constant 0 : index
    %55 = vector.load %arg6[%c0_29, %c0_30] : memref<128x256xbf16, #tpu.memory_space<vmem>>, vector<128x256xbf16>
    %cst_31 = arith.constant dense<0.000000e+00> : vector<16x256xf32>
    %56 = tpu.matmul %54, %55, %cst_31 {dimension_numbers = #tpu.dot_dimension_numbers<[1], [0], [0], [1], [0, 0, 1, 1], [], []>} : vector<16x128xbf16>, vector<128x256xbf16>, vector<16x256xf32> -> vector<16x256xf32>
    %c0_32 = arith.constant 0 : index
    %c1152 = arith.constant 1152 : index
    %57 = vector.load %arg8[%c0_32, %c1152] : memref<1x1536xf32, #tpu.memory_space<vmem>>, vector<1x256xf32>
    %58 = vector.broadcast %57 : vector<1x256xf32> to vector<16x256xf32>
    %59 = arith.addf %56, %58 : vector<16x256xf32>
    %cst_33 = arith.constant 0.000000e+00 : f32
    %60 = vector.broadcast %cst_33 : f32 to vector<16x256xf32>
    %61 = arith.maximumf %59, %60 : vector<16x256xf32>
    %62 = arith.truncf %61 : vector<16x256xf32> to vector<16x256xbf16>
    %c0_34 = arith.constant 0 : index
    %c0_35 = arith.constant 0 : index
    %63 = vector.load %arg7[%c0_34, %c0_35] : memref<256x32xbf16, #tpu.memory_space<vmem>>, vector<256x32xbf16>
    %cst_36 = arith.constant dense<0.000000e+00> : vector<16x32xf32>
    %64 = tpu.matmul %62, %63, %cst_36 {dimension_numbers = #tpu.dot_dimension_numbers<[1], [0], [0], [1], [0, 0, 1, 1], [], []>} : vector<16x256xbf16>, vector<256x32xbf16>, vector<16x32xf32> -> vector<16x32xf32>
    %c0_37 = arith.constant 0 : index
    %c1408 = arith.constant 1408 : index
    %65 = vector.load %arg8[%c0_37, %c1408] : memref<1x1536xf32, #tpu.memory_space<vmem>>, vector<1x32xf32>
    %66 = vector.broadcast %65 : vector<1x32xf32> to vector<16x32xf32>
    %67 = arith.addf %64, %66 : vector<16x32xf32>
    %68 = arith.truncf %67 : vector<16x32xf32> to vector<16x32xbf16>
    %c0_38 = arith.constant 0 : index
    %c0_39 = arith.constant 0 : index
    %69 = vector.load %arg10[%c0_38, %c0_39] : memref<16x32xbf16, #tpu.memory_space<vmem>>, vector<16x32xbf16>
    tpu.vector_store %arg10[%c0_38, %c0_39], %68 {strides = array<i32>} : memref<16x32xbf16, #tpu.memory_space<vmem>>, vector<16x32xbf16>,
    return
  }
  func.func @transform_0(%arg0: i32) -> (i32, i32) {
    %c0_i32 = arith.constant 0 : i32
    %c0_i32_0 = arith.constant 0 : i32
    return %arg0, %c0_i32 : i32, i32
  }
  func.func @transform_1(%arg0: i32) -> (i32, i32) {
    %c0_i32 = arith.constant 0 : i32
    %c0_i32_0 = arith.constant 0 : i32
    %c0_i32_1 = arith.constant 0 : i32
    return %c0_i32, %c0_i32_0 : i32, i32
  }
  func.func @transform_2(%arg0: i32) -> (i32, i32) {
    %c0_i32 = arith.constant 0 : i32
    %c0_i32_0 = arith.constant 0 : i32
    %c0_i32_1 = arith.constant 0 : i32
    return %c0_i32, %c0_i32_0 : i32, i32
  }
  func.func @transform_3(%arg0: i32) -> (i32, i32) {
    %c0_i32 = arith.constant 0 : i32
    %c0_i32_0 = arith.constant 0 : i32
    %c0_i32_1 = arith.constant 0 : i32
    return %c0_i32, %c0_i32_0 : i32, i32
  }
  func.func @transform_4(%arg0: i32) -> (i32, i32) {
    %c0_i32 = arith.constant 0 : i32
    %c0_i32_0 = arith.constant 0 : i32
    %c0_i32_1 = arith.constant 0 : i32
    return %c0_i32, %c0_i32_0 : i32, i32
  }
  func.func @transform_5(%arg0: i32) -> (i32, i32) {
    %c0_i32 = arith.constant 0 : i32
    %c0_i32_0 = arith.constant 0 : i32
    %c0_i32_1 = arith.constant 0 : i32
    return %c0_i32, %c0_i32_0 : i32, i32
  }
  func.func @transform_6(%arg0: i32) -> (i32, i32) {
    %c0_i32 = arith.constant 0 : i32
    %c0_i32_0 = arith.constant 0 : i32
    %c0_i32_1 = arith.constant 0 : i32
    return %c0_i32, %c0_i32_0 : i32, i32
  }
  func.func @transform_7(%arg0: i32) -> (i32, i32) {
    %c0_i32 = arith.constant 0 : i32
    %c0_i32_0 = arith.constant 0 : i32
    %c0_i32_1 = arith.constant 0 : i32
    return %c0_i32, %c0_i32_0 : i32, i32
  }
  func.func @transform_8(%arg0: i32) -> (i32, i32) {
    %c0_i32 = arith.constant 0 : i32
    %c0_i32_0 = arith.constant 0 : i32
    return %arg0, %c0_i32 : i32, i32
  }
  func.func @transform_9(%arg0: i32) -> (i32, i32) {
    %c0_i32 = arith.constant 0 : i32
    %c0_i32_0 = arith.constant 0 : i32
    return %arg0, %c0_i32 : i32, i32
  }
}

</mosaic_0001>

<llo_original>
// kernel: tpu_custom_call.1
$region0: #{tpu_custom_call.1}
  #allocation0 [shape = 'u32[]', space=smem, size = 0x4, offset = 0x4, fixed_abs, tag = 'smem constant byte address 0x4 - core index']
  #allocation1 [shape = 'u32[144,128]{1,0:T(1,128)}', space=vmem, size = 0x12000, scoped, tag = 'internal scratch']
  %s0 = inlined_call_operand.hbm [shape: bf16[32,32], index: 0, kind: input, shape index: {}]
  %s1 = inlined_call_operand.hbm [shape: bf16[32,256], index: 1, kind: input, shape index: {}]
  %s2 = inlined_call_operand.vmem [shape: bf16[256,128], index: 2, kind: input, shape index: {}]
  %s3 = inlined_call_operand.vmem [shape: bf16[128,64], index: 3, kind: input, shape index: {}]
  %s4 = inlined_call_operand.hbm [shape: bf16[64,128], index: 4, kind: input, shape index: {}]
  %s5 = inlined_call_operand.vmem [shape: bf16[128,256], index: 5, kind: input, shape index: {}]
  %s6 = inlined_call_operand.vmem [shape: bf16[256,32], index: 6, kind: input, shape index: {}]
  %s7 = inlined_call_operand.vmem [shape: f32[1,1536], index: 7, kind: input, shape index: {}]
  %s8 = inlined_call_operand.hbm [shape: bf16[32,64], index: 8, kind: output, shape index: {0}]
  %s9 = inlined_call_operand.hbm [shape: bf16[32,32], index: 9, kind: output, shape index: {1}]
  %10 = xla_tuple %s8, %s9
  %s11 = sld [smem:[#allocation0]]
  $region85: #{tpu_custom_call.1} parent=0
    _
  %s13 = ssub.s32 1, %s11
  %s14 = scalar_select 0, %s13, %s11
  $region1: #{tpu_custom_call.1} parent=0
    #allocation2 [shape = 'u8[8192]{0}', space=vmem, size = 0x2000, scoped, tag = 'input window, operand 0']
    #allocation3 [shape = 's32[2]{0}', space=sflag, size = 0x8, scoped, tag = 'scoped memory for tpu_custom_call.1']
    #allocation4 [shape = 's32[2]{0}', space=sflag, size = 0x8, scoped, tag = 'scoped memory for tpu_custom_call.1']
    #allocation5 [shape = 'u8[16384]{0}', space=vmem, size = 0x4000, scoped, tag = 'input window, operand 1, single buffered']
    #allocation6 [shape = 's32[1]{0}', space=sflag, size = 0x4, scoped, tag = 'scoped memory for tpu_custom_call.1']
    #allocation7 [shape = 'u8[16384]{0}', space=vmem, size = 0x4000, scoped, tag = 'input window, operand 4, single buffered']
    #allocation8 [shape = 'u8[8192]{0}', space=vmem, size = 0x2000, scoped, tag = 'output window, operand 0']
    #allocation9 [shape = 'u8[8192]{0}', space=vmem, size = 0x2000, scoped, tag = 'output window, operand 1']
    #allocation10 [shape = 's32[2]{0}', space=sflag, size = 0x8, scoped, tag = 'scoped memory for tpu_custom_call.1']
    %15 = vsyncpa [#allocation3], 0
    %s16 = scalar_lea.sflag [#allocation3], 1
    %17 = vsyncpa %s16, 0
    %18 = vsyncpa [#allocation6], 0
    %19 = vsyncpa [#allocation4], 0
    %s20 = scalar_lea.sflag [#allocation4], 1
    %21 = vsyncpa %s20, 0
    %22 = vsyncpa [#allocation10], 0
    %s23 = scalar_lea.sflag [#allocation10], 1
    %24 = vsyncpa %s23, 0
    loop: start=0, step=1, limit=4
    $region2: #{tpu_custom_call.1} parent=1 // loop_pre_header
      _
    $region3: #{tpu_custom_call.1} parent=1 // loop_header
      %s26 = sphi 0, %s30
      %p27 = scmp.ge.s32.totalorder %s26, 4
      %s36 = sphi 0, %s38
      %s39 = sphi 0, %s36
      %s40 = sphi 0, %s39
      %s56 = sphi 0, %s40
      %s60 = sphi 0, %s60
      %s62 = sphi 0, %s60
      %s63 = sphi 0, %s62
      %s77 = sphi 0, %s63
      %s81 = sphi 0, %s81
      %s83 = sphi 0, %s81
      %s84 = sphi 0, %s83
      %s98 = sphi 0, %s84
      %s102 = sphi 0, %s102
      %s104 = sphi 0, %s102
      %s105 = sphi 0, %s104
      %s119 = sphi 0, %s105
      %s123 = sphi 0, %s123
      %s125 = sphi 0, %s123
      %s126 = sphi 0, %s125
      %s140 = sphi 0, %s126
      %s144 = sphi 0, %s144
      %s146 = sphi 0, %s144
      %s147 = sphi 0, %s146
      %s161 = sphi 0, %s147
      %s165 = sphi 0, %s165
      %s167 = sphi 0, %s165
      %s168 = sphi 0, %s167
      %s182 = sphi 0, %s168
      %s186 = sphi 0, %s186
      %s188 = sphi 0, %s186
      %s189 = sphi 0, %s188
      %s203 = sphi 0, %s189
      %s209 = sphi 0, %s211
      %s212 = sphi 0, %s209
      %s213 = sphi 0, %s212
      %s229 = sphi 0, %s213
      %s235 = sphi 0, %s237
      %s238 = sphi 0, %s235
      %s239 = sphi 0, %s238
      %s255 = sphi 0, %s239
    $region4: #{tpu_custom_call.1} parent=1 // loop_header_branch
      %29 = sbr.rel (%p27) target = $region8
    $region5: #{tpu_custom_call.1} parent=1 // loop_body
      %s31 = ssub.s32 %s26, 1
      %s32 = ssub.s32 %s26, 2
      %s33 = sadd.s32 %s26, 1
      %s34 = ssub.s32 %s26, %s33
      %p35 = scmp.eq.s32.totalorder %s34, 0
      %s37 = sadd.s32 %s36, 1
      %s38 = scalar_select %p35, %s36, %s37
      %p41 = pneg %p35
      %p42 = scmp.eq.s32.totalorder %s26, 1
      %p43 = por %p41, %p42
      %p44 = scmp.ne.s32.totalorder %s36, %s39
      %p45 = scmp.eq.s32.totalorder %s26, 0
      %p46 = por %p44, %p45
      %p47 = scmp.ne.s32.totalorder %s36, %s39
      %p48 = scmp.eq.s32.totalorder %s31, 1
      %p49 = por %p47, %p48
      %p50 = scmp.ne.s32.totalorder %s39, %s40
      %p51 = scmp.eq.s32.totalorder %s31, 0
      %p52 = por %p50, %p51
      %p53 = scmp.ne.s32.totalorder %s39, %s40
      %p54 = scmp.eq.s32.totalorder %s32, 1
      %p55 = por %p53, %p54
      %p57 = scmp.ne.s32.totalorder %s40, %s56
      %p58 = scmp.eq.s32.totalorder %s32, 0
      %p59 = por %p57, %p58
      %s61 = sadd.s32 %s60, 1
      %p64 = scmp.eq.s32.totalorder %s26, 1
      %p65 = scmp.ne.s32.totalorder %s60, %s62
      %p66 = scmp.eq.s32.totalorder %s26, 0
      %p67 = por %p65, %p66
      %p68 = scmp.ne.s32.totalorder %s60, %s62
      %p69 = scmp.eq.s32.totalorder %s31, 1
      %p70 = por %p68, %p69
      %p71 = scmp.ne.s32.totalorder %s62, %s63
      %p72 = scmp.eq.s32.totalorder %s31, 0
      %p73 = por %p71, %p72
      %p74 = scmp.ne.s32.totalorder %s62, %s63
      %p75 = scmp.eq.s32.totalorder %s32, 1
      %p76 = por %p74, %p75
      %p78 = scmp.ne.s32.totalorder %s63, %s77
      %p79 = scmp.eq.s32.totalorder %s32, 0
      %p80 = por %p78, %p79
      %s82 = sadd.s32 %s81, 1
      %p85 = scmp.eq.s32.totalorder %s26, 1
      %p86 = scmp.ne.s32.totalorder %s81, %s83
      %p87 = scmp.eq.s32.totalorder %s26, 0
      %p88 = por %p86, %p87
      %p89 = scmp.ne.s32.totalorder %s81, %s83
      %p90 = scmp.eq.s32.totalorder %s31, 1
      %p91 = por %p89, %p90
      %p92 = scmp.ne.s32.totalorder %s83, %s84
      %p93 = scmp.eq.s32.totalorder %s31, 0
      %p94 = por %p92, %p93
      %p95 = scmp.ne.s32.totalorder %s83, %s84
      %p96 = scmp.eq.s32.totalorder %s32, 1
      %p97 = por %p95, %p96
      %p99 = scmp.ne.s32.totalorder %s84, %s98
      %p100 = scmp.eq.s32.totalorder %s32, 0
      %p101 = por %p99, %p100
      %s103 = sadd.s32 %s102, 1
      %p106 = scmp.eq.s32.totalorder %s26, 1
      %p107 = scmp.ne.s32.totalorder %s102, %s104
      %p108 = scmp.eq.s32.totalorder %s26, 0
      %p109 = por %p107, %p108
      %p110 = scmp.ne.s32.totalorder %s102, %s104
      %p111 = scmp.eq.s32.totalorder %s31, 1
      %p112 = por %p110, %p111
      %p113 = scmp.ne.s32.totalorder %s104, %s105
      %p114 = scmp.eq.s32.totalorder %s31, 0
      %p115 = por %p113, %p114
      %p116 = scmp.ne.s32.totalorder %s104, %s105
      %p117 = scmp.eq.s32.totalorder %s32, 1
      %p118 = por %p116, %p117
      %p120 = scmp.ne.s32.totalorder %s105, %s119
      %p121 = scmp.eq.s32.totalorder %s32, 0
      %p122 = por %p120, %p121
      %s124 = sadd.s32 %s123, 1
      %p127 = scmp.eq.s32.totalorder %s26, 1
      %p128 = scmp.ne.s32.totalorder %s123, %s125
      %p129 = scmp.eq.s32.totalorder %s26, 0
      %p130 = por %p128, %p129
      %p131 = scmp.ne.s32.totalorder %s123, %s125
      %p132 = scmp.eq.s32.totalorder %s31, 1
      %p133 = por %p131, %p132
      %p134 = scmp.ne.s32.totalorder %s125, %s126
      %p135 = scmp.eq.s32.totalorder %s31, 0
      %p136 = por %p134, %p135
      %p137 = scmp.ne.s32.totalorder %s125, %s126
      %p138 = scmp.eq.s32.totalorder %s32, 1
      %p139 = por %p137, %p138
      %p141 = scmp.ne.s32.totalorder %s126, %s140
      %p142 = scmp.eq.s32.totalorder %s32, 0
      %p143 = por %p141, %p142
      %s145 = sadd.s32 %s144, 1
      %p148 = scmp.eq.s32.totalorder %s26, 1
      %p149 = scmp.ne.s32.totalorder %s144, %s146
      %p150 = scmp.eq.s32.totalorder %s26, 0
      %p151 = por %p149, %p150
      %p152 = scmp.ne.s32.totalorder %s144, %s146
      %p153 = scmp.eq.s32.totalorder %s31, 1
      %p154 = por %p152, %p153
      %p155 = scmp.ne.s32.totalorder %s146, %s147
      %p156 = scmp.eq.s32.totalorder %s31, 0
      %p157 = por %p155, %p156
      %p158 = scmp.ne.s32.totalorder %s146, %s147
      %p159 = scmp.eq.s32.totalorder %s32, 1
      %p160 = por %p158, %p159
      %p162 = scmp.ne.s32.totalorder %s147, %s161
      %p163 = scmp.eq.s32.totalorder %s32, 0
      %p164 = por %p162, %p163
      %s166 = sadd.s32 %s165, 1
      %p169 = scmp.eq.s32.totalorder %s26, 1
      %p170 = scmp.ne.s32.totalorder %s165, %s167
      %p171 = scmp.eq.s32.totalorder %s26, 0
      %p172 = por %p170, %p171
      %p173 = scmp.ne.s32.totalorder %s165, %s167
      %p174 = scmp.eq.s32.totalorder %s31, 1
      %p175 = por %p173, %p174
      %p176 = scmp.ne.s32.totalorder %s167, %s168
      %p177 = scmp.eq.s32.totalorder %s31, 0
      %p178 = por %p176, %p177
      %p179 = scmp.ne.s32.totalorder %s167, %s168
      %p180 = scmp.eq.s32.totalorder %s32, 1
      %p181 = por %p179, %p180
      %p183 = scmp.ne.s32.totalorder %s168, %s182
      %p184 = scmp.eq.s32.totalorder %s32, 0
      %p185 = por %p183, %p184
      %s187 = sadd.s32 %s186, 1
      %p190 = scmp.eq.s32.totalorder %s26, 1
      %p191 = scmp.ne.s32.totalorder %s186, %s188
      %p192 = scmp.eq.s32.totalorder %s26, 0
      %p193 = por %p191, %p192
      %p194 = scmp.ne.s32.totalorder %s186, %s188
      %p195 = scmp.eq.s32.totalorder %s31, 1
      %p196 = por %p194, %p195
      %p197 = scmp.ne.s32.totalorder %s188, %s189
      %p198 = scmp.eq.s32.totalorder %s31, 0
      %p199 = por %p197, %p198
      %p200 = scmp.ne.s32.totalorder %s188, %s189
      %p201 = scmp.eq.s32.totalorder %s32, 1
      %p202 = por %p200, %p201
      %p204 = scmp.ne.s32.totalorder %s189, %s203
      %p205 = scmp.eq.s32.totalorder %s32, 0
      %p206 = por %p204, %p205
      %s207 = ssub.s32 %s26, %s33
      %p208 = scmp.eq.s32.totalorder %s207, 0
      %s210 = sadd.s32 %s209, 1
      %s211 = scalar_select %p208, %s209, %s210
      %p214 = pneg %p208
      %p215 = scmp.eq.s32.totalorder %s26, 1
      %p216 = por %p214, %p215
      %p217 = scmp.ne.s32.totalorder %s209, %s212
      %p218 = scmp.eq.s32.totalorder %s26, 0
      %p219 = por %p217, %p218
      %p220 = scmp.ne.s32.totalorder %s209, %s212
      %p221 = scmp.eq.s32.totalorder %s31, 1
      %p222 = por %p220, %p221
      %p223 = scmp.ne.s32.totalorder %s212, %s213
      %p224 = scmp.eq.s32.totalorder %s31, 0
      %p225 = por %p223, %p224
      %p226 = scmp.ne.s32.totalorder %s212, %s213
      %p227 = scmp.eq.s32.totalorder %s32, 1
      %p228 = por %p226, %p227
      %p230 = scmp.ne.s32.totalorder %s213, %s229
      %p231 = scmp.eq.s32.totalorder %s32, 0
      %p232 = por %p230, %p231
      %s233 = ssub.s32 %s26, %s33
      %p234 = scmp.eq.s32.totalorder %s233, 0
      %s236 = sadd.s32 %s235, 1
      %s237 = scalar_select %p234, %s235, %s236
      %p240 = pneg %p234
      %p241 = scmp.eq.s32.totalorder %s26, 1
      %p242 = por %p240, %p241
      %p243 = scmp.ne.s32.totalorder %s235, %s238
      %p244 = scmp.eq.s32.totalorder %s26, 0
      %p245 = por %p243, %p244
      %p246 = scmp.ne.s32.totalorder %s235, %s238
      %p247 = scmp.eq.s32.totalorder %s31, 1
      %p248 = por %p246, %p247
      %p249 = scmp.ne.s32.totalorder %s238, %s239
      %p250 = scmp.eq.s32.totalorder %s31, 0
      %p251 = por %p249, %p250
      %p252 = scmp.ne.s32.totalorder %s238, %s239
      %p253 = scmp.eq.s32.totalorder %s32, 1
      %p254 = por %p252, %p253
      %p256 = scmp.ne.s32.totalorder %s239, %s255
      %p257 = scmp.eq.s32.totalorder %s32, 0
      %p258 = por %p256, %p257
      %p259 = scmp.le.s32.totalorder 1, %s26
      %p260 = scmp.lt.s32.totalorder %s26, 3
      %p261 = pnand %p259, %p260
      %p262 = pneg %p261
      // Predicated region
      $region9: #{tpu_custom_call.1} parent=5 // pred_check
        _
      $region10: #{tpu_custom_call.1} parent=5 // pred_check_branch
        %264 = sbr.rel (%p261) target = $region12
      $region11: #{tpu_custom_call.1} parent=5 // pred_region
        %s265 = ssub.s32 %s26, 1
        // Predicated region
        $region13: #{tpu_custom_call.1} parent=11 // pred_check
          %p266 = pneg %p73
        $region14: #{tpu_custom_call.1} parent=11 // pred_check_branch
          %268 = sbr.rel (%p266) target = $region16
        $region15: #{tpu_custom_call.1} parent=11 // pred_region
          %s270 = ssub.s32 512, 512
          %271 = vsyncadd [#allocation6], %s270
          %s272 = sshll.u32 [#allocation5], 4
          %s273 = int_to_ptr.vmem [resolvable:$true] %s272
          %278 = dma.hbm_to_vmem [thread:$0]  %s1, 512, %s273, [#allocation6], 128, 128, 8
        $region16: #{tpu_custom_call.1} parent=11 // pred_fallthru
          _
        // Predicated region
        $region17: #{tpu_custom_call.1} parent=11 // pred_check
          %p279 = pneg %p94
        $region18: #{tpu_custom_call.1} parent=11 // pred_check_branch
          %281 = sbr.rel (%p279) target = $region20
        $region19: #{tpu_custom_call.1} parent=11 // pred_region
          _
        $region20: #{tpu_custom_call.1} parent=11 // pred_fallthru
          _
        // Predicated region
        $region21: #{tpu_custom_call.1} parent=11 // pred_check
          %p282 = pneg %p115
        $region22: #{tpu_custom_call.1} parent=11 // pred_check_branch
          %284 = sbr.rel (%p282) target = $region24
        $region23: #{tpu_custom_call.1} parent=11 // pred_region
          _
        $region24: #{tpu_custom_call.1} parent=11 // pred_fallthru
          _
        // Predicated region
        $region25: #{tpu_custom_call.1} parent=11 // pred_check
          %p285 = pneg %p136
        $region26: #{tpu_custom_call.1} parent=11 // pred_check_branch
          %287 = sbr.rel (%p285) target = $region28
        $region27: #{tpu_custom_call.1} parent=11 // pred_region
          %s289 = ssub.s32 512, 512
          %290 = vsyncadd [#allocation6], %s289
          %s291 = sshll.u32 [#allocation7], 4
          %s292 = int_to_ptr.vmem [resolvable:$true] %s291
          %297 = dma.hbm_to_vmem [thread:$0]  %s4, 512, %s292, [#allocation6], 64, 64, 4
        $region28: #{tpu_custom_call.1} parent=11 // pred_fallthru
          _
        // Predicated region
        $region29: #{tpu_custom_call.1} parent=11 // pred_check
          %p298 = pneg %p157
        $region30: #{tpu_custom_call.1} parent=11 // pred_check_branch
          %300 = sbr.rel (%p298) target = $region32
        $region31: #{tpu_custom_call.1} parent=11 // pred_region
          _
        $region32: #{tpu_custom_call.1} parent=11 // pred_fallthru
          _
        // Predicated region
        $region33: #{tpu_custom_call.1} parent=11 // pred_check
          %p301 = pneg %p178
        $region34: #{tpu_custom_call.1} parent=11 // pred_check_branch
          %303 = sbr.rel (%p301) target = $region36
        $region35: #{tpu_custom_call.1} parent=11 // pred_region
          _
        $region36: #{tpu_custom_call.1} parent=11 // pred_fallthru
          _
        // Predicated region
        $region37: #{tpu_custom_call.1} parent=11 // pred_check
          %p304 = pneg %p199
        $region38: #{tpu_custom_call.1} parent=11 // pred_check_branch
          %306 = sbr.rel (%p304) target = $region40
        $region39: #{tpu_custom_call.1} parent=11 // pred_region
          _
        $region40: #{tpu_custom_call.1} parent=11 // pred_fallthru
          _
      $region12: #{tpu_custom_call.1} parent=5 // pred_fallthru
        _
      %p307 = scmp.lt.s32.totalorder %s26, 2
      // Predicated region
      $region41: #{tpu_custom_call.1} parent=5 // pred_check
        %p308 = pneg %p307
      $region42: #{tpu_custom_call.1} parent=5 // pred_check_branch
        %310 = sbr.rel (%p308) target = $region44
      $region43: #{tpu_custom_call.1} parent=5 // pred_region
        // Predicated region
        $region45: #{tpu_custom_call.1} parent=43 // pred_check
          %p311 = pneg %p46
        $region46: #{tpu_custom_call.1} parent=43 // pred_check_branch
          %313 = sbr.rel (%p311) target = $region48
        $region47: #{tpu_custom_call.1} parent=43 // pred_region
          %s314 = sand.u32 %s36, 1
          %s315 = scalar_lea.sflag [#allocation3], %s314
          %s316 = sand.u32 %s36, 1
          %s317 = smul.addr %s316, 8
          %s318 = scalar_lea.vmem [#allocation2], %s317
          %s319 = smul.u32 2, %s26
          %s321 = ssub.s32 128, 128
          %322 = vsyncadd %s315, %s321
          %s323 = smul.addr %s319, 64
          %s324 = scalar_lea.hbm %s0, %s323
          %s325 = sshll.u32 %s318, 4
          %s326 = int_to_ptr.vmem [resolvable:$true] %s325
          %331 = dma.hbm_to_vmem [thread:$0]  %s324, 128, %s326, %s315, 64, 64, 4
        $region48: #{tpu_custom_call.1} parent=43 // pred_fallthru
          _
      $region44: #{tpu_custom_call.1} parent=5 // pred_fallthru
        _
      %p332 = scmp.le.s32.totalorder 1, %s26
      %p333 = scmp.lt.s32.totalorder %s26, 3
      %p334 = pnand %p332, %p333
      %p335 = pneg %p334
      // Predicated region
      $region49: #{tpu_custom_call.1} parent=5 // pred_check
        _
      $region50: #{tpu_custom_call.1} parent=5 // pred_check_branch
        %337 = sbr.rel (%p334) target = $region52
      $region51: #{tpu_custom_call.1} parent=5 // pred_region
        %s338 = ssub.s32 %s26, 1
        %s339 = sand.u32 %s39, 1
        %s340 = scalar_lea.sflag [#allocation3], %s339
        %s341 = sand.u32 %s39, 1
        %s342 = smul.addr %s341, 8
        %s343 = scalar_lea.vmem [#allocation2], %s342
        // Predicated region
        $region53: #{tpu_custom_call.1} parent=51 // pred_check
          %p344 = pneg %p52
        $region54: #{tpu_custom_call.1} parent=51 // pred_check_branch
          %346 = sbr.rel (%p344) target = $region56
        $region55: #{tpu_custom_call.1} parent=51 // pred_region
          %347 = dma.done %s340, 128
        $region56: #{tpu_custom_call.1} parent=51 // pred_fallthru
          _
        // Predicated region
        $region57: #{tpu_custom_call.1} parent=51 // pred_check
          %p348 = pneg %p73
        $region58: #{tpu_custom_call.1} parent=51 // pred_check_branch
          %350 = sbr.rel (%p348) target = $region60
        $region59: #{tpu_custom_call.1} parent=51 // pred_region
          %351 = dma.done [#allocation6], 512
        $region60: #{tpu_custom_call.1} parent=51 // pred_fallthru
          _
        // Predicated region
        $region61: #{tpu_custom_call.1} parent=51 // pred_check
          %p352 = pneg %p136
        $region62: #{tpu_custom_call.1} parent=51 // pred_check_branch
          %354 = sbr.rel (%p352) target = $region64
        $region63: #{tpu_custom_call.1} parent=51 // pred_region
          %355 = dma.done [#allocation6], 512
        $region64: #{tpu_custom_call.1} parent=51 // pred_fallthru
          _
        %s356 = sand.u32 %s39, 1
        %s357 = scalar_lea.sflag [#allocation3], %s356
        %s358 = sand.u32 %s39, 1
        %s359 = smul.addr %s358, 8
        %s360 = scalar_lea.vmem [#allocation2], %s359
        %p361 = pneg %p52
        %p362 = pneg %p49
        %p363 = pneg %p73
        %p364 = pneg %p70
        %p365 = pneg %p94
        %p366 = pneg %p91
        %p367 = pneg %p115
        %p368 = pneg %p112
        %p369 = pneg %p136
        %p370 = pneg %p133
        %p371 = pneg %p157
        %p372 = pneg %p154
        %p373 = pneg %p178
        %p374 = pneg %p175
        %p375 = pneg %p199
        %p376 = pneg %p196
        %p377 = pneg %p225
        %p378 = pneg %p222
        %s379 = sand.u32 %s212, 1
        %s380 = scalar_lea.sflag [#allocation4], %s379
        %s381 = sand.u32 %s212, 1
        %s382 = smul.addr %s381, 8
        %s383 = scalar_lea.vmem [#allocation8], %s382
        %p384 = pneg %p251
        %p385 = pneg %p248
        %s386 = sand.u32 %s238, 1
        %s387 = scalar_lea.sflag [#allocation10], %s386
        %s388 = sand.u32 %s238, 1
        %s389 = smul.addr %s388, 8
        %s390 = scalar_lea.vmem [#allocation9], %s389
        %s391 = smul.u32 2, %s31
        %s392 = smul.u32 2, %s31
        %s393 = smul.u32 2, %s31
        %v395 = vld [vmem:[%s343] sm:$0xf]
        %v396 = vld [vmem:[%s343 + $0x4] sm:$0xf]
        %v397 = vld [vmem:[#allocation5] sm:$0xff]
        %v398 = vld [vmem:[#allocation5 + $0x8] sm:$0xff]
        %v399 = vld [vmem:[#allocation5 + $0x10] sm:$0xff]
        %v400 = vld [vmem:[#allocation5 + $0x18] sm:$0xff]
        %v401 = vld [vmem:[%s7] sm:$0x3]
        %v403 = vlaneseq
        %v404 = vshrl.u32 %v403, 7
        %v405 = vsub.s32 0, %v404
        %v406 = vrot.slane %v401, %v405
        %v407 = vlaneseq
        %v408 = vshrl.u32 %v407, 7
        %v409 = vsub.s32 1, %v408
        %v410 = vrot.slane %v401, %v409
        %v415 = vunpack.c.l.b16 %v395
        %v416 = vunpack.c.l.b16 %v396
        %v417 = vpack.c.b16 %v416, %v415
        %v422 = vunpack.c.l.b16 %v397
        %v423 = vunpack.c.h.b16 %v397
        %v424 = vunpack.c.l.b16 %v398
        %v425 = vunpack.c.h.b16 %v398
        %v426 = vunpack.c.l.b16 %v399
        %v427 = vunpack.c.h.b16 %v399
        %v428 = vunpack.c.l.b16 %v400
        %v429 = vunpack.c.h.b16 %v400
        %v430 = vpack.c.b16 %v424, %v422
        %v431 = vpack.c.b16 %v425, %v423
        %v432 = vpack.c.b16 %v428, %v426
        %v433 = vpack.c.b16 %v429, %v427
        %vm438 = vcmask 261120
        %v440 = vsel %vm438, %v417, 0
        %442 = vmatprep.subr.bf16.mxu0 %v431
        %443 = vmatpush1.bf16.msra.mxu0 %v430
        %444 = vmatprep.subr.bf16.mxu0 %v433
        %445 = vmatpush1.bf16.msra.mxu0 %v432
        %446 = vmatprep.subr.bf16.mxu0 0
        %447 = vmatpush1.bf16.msra.mxu0 0
        %448 = vmatprep.subr.bf16.mxu0 0
        %449 = vmatpush1.bf16.msra.mxu0 0
        %450 = vmatprep.subr.bf16.mxu0 0
        %451 = vmatpush1.bf16.msra.mxu0 0
        %452 = vmatprep.subr.bf16.mxu0 0
        %453 = vmatpush1.bf16.msra.mxu0 0
        %454 = vmatprep.subr.bf16.mxu0 0
        %455 = vmatpush1.bf16.msra.mxu0 0
        %456 = vmatprep.subr.bf16.mxu0 0
        %457 = vmatpush1.bf16.msra.mxu0 0
        %458 = vmatprep.subr.bf16.mxu0 0
        %459 = vmatpush1.bf16.msra.mxu0 0
        %460 = vmatprep.subr.bf16.mxu0 0
        %461 = vmatpush1.bf16.msra.mxu0 0
        %462 = vmatprep.subr.bf16.mxu0 0
        %463 = vmatpush1.bf16.msra.mxu0 0
        %464 = vmatprep.subr.bf16.mxu0 0
        %465 = vmatpush1.bf16.msra.mxu0 0
        %466 = vmatprep.subr.bf16.mxu0 0
        %467 = vmatpush1.bf16.msra.mxu0 0
        %468 = vmatprep.subr.bf16.mxu0 0
        %469 = vmatpush1.bf16.msra.mxu0 0
        %470 = vmatprep.subr.bf16.mxu0 0
        %471 = vmatpush1.bf16.msra.mxu0 0
        %472 = vmatprep.subr.bf16.mxu0 0
        %473 = vmatpush1.bf16.msra.mxu0 0
        %474 = vmatprep.mubr.bf16.mxu0 0
        %475 = vmatmul.mubr.bf16.gmra.mrb[0].mxu0 %v440
        %v476 = vpop.f32.mrb[0].mxu0
        %v477 = vadd.f32 %v406, %v476
        %v478 = vpop.f32.mrb[0].mxu0
        %v479 = vadd.f32 %v410, %v478
        %v480 = vpop.f32.mrb[0].mxu0
        %v481 = vadd.f32 %v406, %v480
        %v482 = vpop.f32.mrb[0].mxu0
        %v483 = vadd.f32 %v410, %v482
        %484 = vdwg.mxu0
        %v485 = vadd.f32 %v477, %v479
        %486 = vadd.xlane.f32.xlu0 %v485
        %v487 = vpop.xlane.xlu0 %486
        %v488 = vadd.f32 %v481, %v483
        %489 = vadd.xlane.f32.xlu0 %v488
        %v490 = vpop.xlane.xlu0 %489
        %v491 = vrcp.pop 256.0
        %v492 = vmul.f32 %v487, %v491
        %v493 = vmul.f32 %v490, %v491
        %v494 = vsub.f32 %v477, %v492
        %v495 = vsub.f32 %v479, %v492
        %v496 = vsub.f32 %v481, %v493
        %v497 = vsub.f32 %v483, %v493
        %v498 = vmul.f32 %v494, %v494
        %v499 = vmul.f32 %v495, %v495
        %v500 = vmul.f32 %v496, %v496
        %v501 = vmul.f32 %v497, %v497
        %v502 = vadd.f32 %v498, %v499
        %503 = vadd.xlane.f32.xlu0 %v502
        %v504 = vpop.xlane.xlu0 %503
        %v505 = vadd.f32 %v500, %v501
        %506 = vadd.xlane.f32.xlu0 %v505
        %v507 = vpop.xlane.xlu0 %506
        %v508 = vmul.f32 %v504, %v491
        %v509 = vmul.f32 %v507, %v491
        %v510 = vadd.f32 %v508, 1e-05
        %v511 = vadd.f32 %v509, 1e-05
        %v512 = vrsqrt.pop %v510
        %v513 = vrsqrt.pop %v511
        %v514 = vmul.f32 %v494, %v512
        %v515 = vmul.f32 %v495, %v512
        %v516 = vmul.f32 %v496, %v513
        %v517 = vmul.f32 %v497, %v513
        %v518 = vld [vmem:[%s7 + $0x2] sm:$0x3]
        %v520 = vlaneseq
        %v521 = vshrl.u32 %v520, 7
        %v522 = vsub.s32 0, %v521
        %v523 = vrot.slane %v518, %v522
        %v524 = vlaneseq
        %v525 = vshrl.u32 %v524, 7
        %v526 = vsub.s32 1, %v525
        %v527 = vrot.slane %v518, %v526
        %v530 = vmul.f32 %v514, %v523
        %v531 = vmul.f32 %v515, %v527
        %v532 = vmul.f32 %v516, %v523
        %v533 = vmul.f32 %v517, %v527
        %v534 = vld [vmem:[%s7 + $0x4] sm:$0x3]
        %v536 = vlaneseq
        %v537 = vshrl.u32 %v536, 7
        %v538 = vsub.s32 0, %v537
        %v539 = vrot.slane %v534, %v538
        %v540 = vlaneseq
        %v541 = vshrl.u32 %v540, 7
        %v542 = vsub.s32 1, %v541
        %v543 = vrot.slane %v534, %v542
        %v546 = vadd.f32 %v530, %v539
        %v547 = vadd.f32 %v531, %v543
        %v548 = vadd.f32 %v532, %v539
        %v549 = vadd.f32 %v533, %v543
        %v550 = vmax.f32 %v546, 0.0
        %v551 = vmax.f32 %v547, 0.0
        %v552 = vmax.f32 %v548, 0.0
        %v553 = vmax.f32 %v549, 0.0
        %v554 = vpack.c.bf16 %v552, %v550
        %v555 = vpack.c.bf16 %v553, %v551
        %v556 = vld [vmem:[%s2] sm:$0xf]
        %v557 = vld [vmem:[%s2 + $0x4] sm:$0xf]
        %v558 = vld [vmem:[%s2 + $0x8] sm:$0xf]
        %v559 = vld [vmem:[%s2 + $0xc] sm:$0xf]
        %v560 = vld [vmem:[%s2 + $0x10] sm:$0xf]
        %v561 = vld [vmem:[%s2 + $0x14] sm:$0xf]
        %v562 = vld [vmem:[%s2 + $0x18] sm:$0xf]
        %v563 = vld [vmem:[%s2 + $0x1c] sm:$0xf]
        %v564 = vld [vmem:[%s2 + $0x20] sm:$0xf]
        %v565 = vld [vmem:[%s2 + $0x24] sm:$0xf]
        %v566 = vld [vmem:[%s2 + $0x28] sm:$0xf]
        %v567 = vld [vmem:[%s2 + $0x2c] sm:$0xf]
        %v568 = vld [vmem:[%s2 + $0x30] sm:$0xf]
        %v569 = vld [vmem:[%s2 + $0x34] sm:$0xf]
        %v570 = vld [vmem:[%s2 + $0x38] sm:$0xf]
        %v571 = vld [vmem:[%s2 + $0x3c] sm:$0xf]
        %v572 = vld [vmem:[%s2 + $0x40] sm:$0xf]
        %v573 = vld [vmem:[%s2 + $0x44] sm:$0xf]
        %v574 = vld [vmem:[%s2 + $0x48] sm:$0xf]
        %v575 = vld [vmem:[%s2 + $0x4c] sm:$0xf]
        %v576 = vld [vmem:[%s2 + $0x50] sm:$0xf]
        %v577 = vld [vmem:[%s2 + $0x54] sm:$0xf]
        %v578 = vld [vmem:[%s2 + $0x58] sm:$0xf]
        %v579 = vld [vmem:[%s2 + $0x5c] sm:$0xf]
        %v580 = vld [vmem:[%s2 + $0x60] sm:$0xf]
        %v581 = vld [vmem:[%s2 + $0x64] sm:$0xf]
        %v582 = vld [vmem:[%s2 + $0x68] sm:$0xf]
        %v583 = vld [vmem:[%s2 + $0x6c] sm:$0xf]
        %v584 = vld [vmem:[%s2 + $0x70] sm:$0xf]
        %v585 = vld [vmem:[%s2 + $0x74] sm:$0xf]
        %v586 = vld [vmem:[%s2 + $0x78] sm:$0xf]
        %v587 = vld [vmem:[%s2 + $0x7c] sm:$0xf]
        %v588 = vld [vmem:[%s7 + $0x6] sm:$0x1]
        %v590 = vlaneseq
        %v591 = vshrl.u32 %v590, 7
        %v592 = vsub.s32 0, %v591
        %v593 = vrot.slane %v588, %v592
        %v627 = vunpack.c.l.b16 %v556
        %v628 = vunpack.c.l.b16 %v557
        %v629 = vunpack.c.l.b16 %v558
        %v630 = vunpack.c.l.b16 %v559
        %v631 = vunpack.c.l.b16 %v560
        %v632 = vunpack.c.l.b16 %v561
        %v633 = vunpack.c.l.b16 %v562
        %v634 = vunpack.c.l.b16 %v563
        %v635 = vunpack.c.l.b16 %v564
        %v636 = vunpack.c.l.b16 %v565
        %v637 = vunpack.c.l.b16 %v566
        %v638 = vunpack.c.l.b16 %v567
        %v639 = vunpack.c.l.b16 %v568
        %v640 = vunpack.c.l.b16 %v569
        %v641 = vunpack.c.l.b16 %v570
        %v642 = vunpack.c.l.b16 %v571
        %v643 = vunpack.c.l.b16 %v572
        %v644 = vunpack.c.l.b16 %v573
        %v645 = vunpack.c.l.b16 %v574
        %v646 = vunpack.c.l.b16 %v575
        %v647 = vunpack.c.l.b16 %v576
        %v648 = vunpack.c.l.b16 %v577
        %v649 = vunpack.c.l.b16 %v578
        %v650 = vunpack.c.l.b16 %v579
        %v651 = vunpack.c.l.b16 %v580
        %v652 = vunpack.c.l.b16 %v581
        %v653 = vunpack.c.l.b16 %v582
        %v654 = vunpack.c.l.b16 %v583
        %v655 = vunpack.c.l.b16 %v584
        %v656 = vunpack.c.l.b16 %v585
        %v657 = vunpack.c.l.b16 %v586
        %v658 = vunpack.c.l.b16 %v587
        %v659 = vpack.c.b16 %v628, %v627
        %v660 = vpack.c.b16 %v630, %v629
        %v661 = vpack.c.b16 %v632, %v631
        %v662 = vpack.c.b16 %v634, %v633
        %v663 = vpack.c.b16 %v636, %v635
        %v664 = vpack.c.b16 %v638, %v637
        %v665 = vpack.c.b16 %v640, %v639
        %v666 = vpack.c.b16 %v642, %v641
        %v667 = vpack.c.b16 %v644, %v643
        %v668 = vpack.c.b16 %v646, %v645
        %v669 = vpack.c.b16 %v648, %v647
        %v670 = vpack.c.b16 %v650, %v649
        %v671 = vpack.c.b16 %v652, %v651
        %v672 = vpack.c.b16 %v654, %v653
        %v673 = vpack.c.b16 %v656, %v655
        %v674 = vpack.c.b16 %v658, %v657
        %691 = vmatprep.subr.bf16.mxu0 0
        %692 = vmatpush1.bf16.msra.mxu0 %v659
        %693 = vmatprep.subr.bf16.mxu0 0
        %694 = vmatpush1.bf16.msra.mxu0 %v660
        %695 = vmatprep.subr.bf16.mxu0 0
        %696 = vmatpush1.bf16.msra.mxu0 %v661
        %697 = vmatprep.subr.bf16.mxu0 0
        %698 = vmatpush1.bf16.msra.mxu0 %v662
        %699 = vmatprep.subr.bf16.mxu0 0
        %700 = vmatpush1.bf16.msra.mxu0 %v663
        %701 = vmatprep.subr.bf16.mxu0 0
        %702 = vmatpush1.bf16.msra.mxu0 %v664
        %703 = vmatprep.subr.bf16.mxu0 0
        %704 = vmatpush1.bf16.msra.mxu0 %v665
        %705 = vmatprep.subr.bf16.mxu0 0
        %706 = vmatpush1.bf16.msra.mxu0 %v666
        %707 = vmatprep.subr.bf16.mxu0 0
        %708 = vmatpush1.bf16.msra.mxu0 %v667
        %709 = vmatprep.subr.bf16.mxu0 0
        %710 = vmatpush1.bf16.msra.mxu0 %v668
        %711 = vmatprep.subr.bf16.mxu0 0
        %712 = vmatpush1.bf16.msra.mxu0 %v669
        %713 = vmatprep.subr.bf16.mxu0 0
        %714 = vmatpush1.bf16.msra.mxu0 %v670
        %715 = vmatprep.subr.bf16.mxu0 0
        %716 = vmatpush1.bf16.msra.mxu0 %v671
        %717 = vmatprep.subr.bf16.mxu0 0
        %718 = vmatpush1.bf16.msra.mxu0 %v672
        %719 = vmatprep.subr.bf16.mxu0 0
        %720 = vmatpush1.bf16.msra.mxu0 %v673
        %721 = vmatprep.subr.bf16.mxu0 0
        %722 = vmatpush1.bf16.msra.mxu0 %v674
        %723 = vmatprep.mubr.bf16.mxu0 %v555
        %724 = vmatmul.mubr.bf16.gmra.mrb[0].mxu0 %v554
        %v725 = vpop.f32.mrb[0].mxu0
        %v726 = vadd.f32 %v593, %v725
        %v727 = vpop.f32.mrb[0].mxu0
        %v728 = vpop.f32.mrb[0].mxu0
        %v729 = vadd.f32 %v593, %v728
        %v730 = vpop.f32.mrb[0].mxu0
        %731 = vdwg.mxu0
        %v732 = vmax.f32 %v726, 0.0
        %v733 = vmax.f32 %v729, 0.0
        %v734 = vpack.c.bf16 %v733, %v732
        %v735 = vld [vmem:[%s3] sm:$0xf]
        %v736 = vld [vmem:[%s3 + $0x4] sm:$0xf]
        %v737 = vld [vmem:[%s3 + $0x8] sm:$0xf]
        %v738 = vld [vmem:[%s3 + $0xc] sm:$0xf]
        %v739 = vld [vmem:[%s3 + $0x10] sm:$0xf]
        %v740 = vld [vmem:[%s3 + $0x14] sm:$0xf]
        %v741 = vld [vmem:[%s3 + $0x18] sm:$0xf]
        %v742 = vld [vmem:[%s3 + $0x1c] sm:$0xf]
        %v743 = vld [vmem:[%s3 + $0x20] sm:$0xf]
        %v744 = vld [vmem:[%s3 + $0x24] sm:$0xf]
        %v745 = vld [vmem:[%s3 + $0x28] sm:$0xf]
        %v746 = vld [vmem:[%s3 + $0x2c] sm:$0xf]
        %v747 = vld [vmem:[%s3 + $0x30] sm:$0xf]
        %v748 = vld [vmem:[%s3 + $0x34] sm:$0xf]
        %v749 = vld [vmem:[%s3 + $0x38] sm:$0xf]
        %v750 = vld [vmem:[%s3 + $0x3c] sm:$0xf]
        %v751 = vld [vmem:[%s7 + $0x7] sm:$0x1]
        %v753 = vlaneseq
        %v754 = vshrl.u32 %v753, 7
        %v755 = vsub.s32 0, %v754
        %v756 = vrot.slane %v751, %v755
        %v774 = vunpack.c.l.b16 %v735
        %v775 = vunpack.c.l.b16 %v736
        %v776 = vunpack.c.l.b16 %v737
        %v777 = vunpack.c.l.b16 %v738
        %v778 = vunpack.c.l.b16 %v739
        %v779 = vunpack.c.l.b16 %v740
        %v780 = vunpack.c.l.b16 %v741
        %v781 = vunpack.c.l.b16 %v742
        %v782 = vunpack.c.l.b16 %v743
        %v783 = vunpack.c.l.b16 %v744
        %v784 = vunpack.c.l.b16 %v745
        %v785 = vunpack.c.l.b16 %v746
        %v786 = vunpack.c.l.b16 %v747
        %v787 = vunpack.c.l.b16 %v748
        %v788 = vunpack.c.l.b16 %v749
        %v789 = vunpack.c.l.b16 %v750
        %v790 = vpack.c.b16 %v775, %v774
        %v791 = vpack.c.b16 %v777, %v776
        %v792 = vpack.c.b16 %v779, %v778
        %v793 = vpack.c.b16 %v781, %v780
        %v794 = vpack.c.b16 %v783, %v782
        %v795 = vpack.c.b16 %v785, %v784
        %v796 = vpack.c.b16 %v787, %v786
        %v797 = vpack.c.b16 %v789, %v788
        %806 = vmatprep.subr.bf16.mxu0 0
        %807 = vmatpush1.bf16.msra.mxu0 %v790
        %808 = vmatprep.subr.bf16.mxu0 0
        %809 = vmatpush1.bf16.msra.mxu0 %v791
        %810 = vmatprep.subr.bf16.mxu0 0
        %811 = vmatpush1.bf16.msra.mxu0 %v792
        %812 = vmatprep.subr.bf16.mxu0 0
        %813 = vmatpush1.bf16.msra.mxu0 %v793
        %814 = vmatprep.subr.bf16.mxu0 0
        %815 = vmatpush1.bf16.msra.mxu0 %v794
        %816 = vmatprep.subr.bf16.mxu0 0
        %817 = vmatpush1.bf16.msra.mxu0 %v795
        %818 = vmatprep.subr.bf16.mxu0 0
        %819 = vmatpush1.bf16.msra.mxu0 %v796
        %820 = vmatprep.subr.bf16.mxu0 0
        %821 = vmatpush1.bf16.msra.mxu0 %v797
        %822 = vmatprep.subr.bf16.mxu0 0
        %823 = vmatpush1.bf16.msra.mxu0 0
        %824 = vmatprep.subr.bf16.mxu0 0
        %825 = vmatpush1.bf16.msra.mxu0 0
        %826 = vmatprep.subr.bf16.mxu0 0
        %827 = vmatpush1.bf16.msra.mxu0 0
        %828 = vmatprep.subr.bf16.mxu0 0
        %829 = vmatpush1.bf16.msra.mxu0 0
        %830 = vmatprep.subr.bf16.mxu0 0
        %831 = vmatpush1.bf16.msra.mxu0 0
        %832 = vmatprep.subr.bf16.mxu0 0
        %833 = vmatpush1.bf16.msra.mxu0 0
        %834 = vmatprep.subr.bf16.mxu0 0
        %835 = vmatpush1.bf16.msra.mxu0 0
        %836 = vmatprep.subr.bf16.mxu0 0
        %837 = vmatpush1.bf16.msra.mxu0 0
        %838 = vmatprep.mubr.bf16.mxu0 0
        %839 = vmatmul.mubr.bf16.gmra.mrb[0].mxu0 %v734
        %v840 = vpop.f32.mrb[0].mxu0
        %v841 = vadd.f32 %v756, %v840
        %v842 = vpop.f32.mrb[0].mxu0
        %v843 = vpop.f32.mrb[0].mxu0
        %v844 = vadd.f32 %v756, %v843
        %v845 = vpop.f32.mrb[0].mxu0
        %846 = vdwg.mxu0
        %v847 = vpack.c.bf16 %v844, %v841
        %v849 = vunpack.c.l.b16 %v847
        %v850 = vunpack.c.h.b16 %v847
        %v851 = vpack.c.b16 %v849, %v849
        %v852 = vpack.c.b16 %v850, %v850
        %vm855 = vcmask 519168
        %856 = vst.msk [vmem:[%s383] sm:$0xf] %vm855, %v851
        %857 = vst.msk [vmem:[%s383 + $0x4] sm:$0xf] %vm855, %v852
        %v858 = vld [vmem:[#allocation7] sm:$0xf]
        %v859 = vld [vmem:[#allocation7 + $0x4] sm:$0xf]
        %v860 = vld [vmem:[#allocation7 + $0x8] sm:$0xf]
        %v861 = vld [vmem:[#allocation7 + $0xc] sm:$0xf]
        %v862 = vld [vmem:[#allocation7 + $0x10] sm:$0xf]
        %v863 = vld [vmem:[#allocation7 + $0x14] sm:$0xf]
        %v864 = vld [vmem:[#allocation7 + $0x18] sm:$0xf]
        %v865 = vld [vmem:[#allocation7 + $0x1c] sm:$0xf]
        %v866 = vld [vmem:[%s7 + $0x8] sm:$0x1]
        %v868 = vlaneseq
        %v869 = vshrl.u32 %v868, 7
        %v870 = vsub.s32 0, %v869
        %v871 = vrot.slane %v866, %v870
        %v881 = vunpack.c.l.b16 %v858
        %v882 = vunpack.c.l.b16 %v859
        %v883 = vunpack.c.l.b16 %v860
        %v884 = vunpack.c.l.b16 %v861
        %v885 = vunpack.c.l.b16 %v862
        %v886 = vunpack.c.l.b16 %v863
        %v887 = vunpack.c.l.b16 %v864
        %v888 = vunpack.c.l.b16 %v865
        %v889 = vpack.c.b16 %v882, %v881
        %v890 = vpack.c.b16 %v884, %v883
        %v891 = vpack.c.b16 %v886, %v885
        %v892 = vpack.c.b16 %v888, %v887
        %vm897 = vcmask 523264
        %v899 = vsel %vm897, %v847, 0
        %901 = vmatprep.subr.bf16.mxu0 0
        %902 = vmatpush1.bf16.msra.mxu0 %v889
        %903 = vmatprep.subr.bf16.mxu0 0
        %904 = vmatpush1.bf16.msra.mxu0 %v890
        %905 = vmatprep.subr.bf16.mxu0 0
        %906 = vmatpush1.bf16.msra.mxu0 %v891
        %907 = vmatprep.subr.bf16.mxu0 0
        %908 = vmatpush1.bf16.msra.mxu0 %v892
        %909 = vmatprep.subr.bf16.mxu0 0
        %910 = vmatpush1.bf16.msra.mxu0 0
        %911 = vmatprep.subr.bf16.mxu0 0
        %912 = vmatpush1.bf16.msra.mxu0 0
        %913 = vmatprep.subr.bf16.mxu0 0
        %914 = vmatpush1.bf16.msra.mxu0 0
        %915 = vmatprep.subr.bf16.mxu0 0
        %916 = vmatpush1.bf16.msra.mxu0 0
        %917 = vmatprep.subr.bf16.mxu0 0
        %918 = vmatpush1.bf16.msra.mxu0 0
        %919 = vmatprep.subr.bf16.mxu0 0
        %920 = vmatpush1.bf16.msra.mxu0 0
        %921 = vmatprep.subr.bf16.mxu0 0
        %922 = vmatpush1.bf16.msra.mxu0 0
        %923 = vmatprep.subr.bf16.mxu0 0
        %924 = vmatpush1.bf16.msra.mxu0 0
        %925 = vmatprep.subr.bf16.mxu0 0
        %926 = vmatpush1.bf16.msra.mxu0 0
        %927 = vmatprep.subr.bf16.mxu0 0
        %928 = vmatpush1.bf16.msra.mxu0 0
        %929 = vmatprep.subr.bf16.mxu0 0
        %930 = vmatpush1.bf16.msra.mxu0 0
        %931 = vmatprep.subr.bf16.mxu0 0
        %932 = vmatpush1.bf16.msra.mxu0 0
        %933 = vmatprep.mubr.bf16.mxu0 0
        %934 = vmatmul.mubr.bf16.gmra.mrb[0].mxu0 %v899
        %v935 = vpop.f32.mrb[0].mxu0
        %v936 = vadd.f32 %v871, %v935
        %v937 = vpop.f32.mrb[0].mxu0
        %v938 = vpop.f32.mrb[0].mxu0
        %v939 = vadd.f32 %v871, %v938
        %v940 = vpop.f32.mrb[0].mxu0
        %941 = vdwg.mxu0
        %v942 = vmax.f32 %v936, 0.0
        %v943 = vmax.f32 %v939, 0.0
        %v944 = vpack.c.bf16 %v943, %v942
        %v945 = vld [vmem:[%s5] sm:$0xff]
        %v946 = vld [vmem:[%s5 + $0x8] sm:$0xff]
        %v947 = vld [vmem:[%s5 + $0x10] sm:$0xff]
        %v948 = vld [vmem:[%s5 + $0x18] sm:$0xff]
        %v949 = vld [vmem:[%s5 + $0x20] sm:$0xff]
        %v950 = vld [vmem:[%s5 + $0x28] sm:$0xff]
        %v951 = vld [vmem:[%s5 + $0x30] sm:$0xff]
        %v952 = vld [vmem:[%s5 + $0x38] sm:$0xff]
        %v953 = vld [vmem:[%s5 + $0x40] sm:$0xff]
        %v954 = vld [vmem:[%s5 + $0x48] sm:$0xff]
        %v955 = vld [vmem:[%s5 + $0x50] sm:$0xff]
        %v956 = vld [vmem:[%s5 + $0x58] sm:$0xff]
        %v957 = vld [vmem:[%s5 + $0x60] sm:$0xff]
        %v958 = vld [vmem:[%s5 + $0x68] sm:$0xff]
        %v959 = vld [vmem:[%s5 + $0x70] sm:$0xff]
        %v960 = vld [vmem:[%s5 + $0x78] sm:$0xff]
        %v961 = vld [vmem:[%s7 + $0x9] sm:$0x3]
        %v963 = vlaneseq
        %v964 = vshrl.u32 %v963, 7
        %v965 = vsub.s32 0, %v964
        %v966 = vrot.slane %v961, %v965
        %v967 = vlaneseq
        %v968 = vshrl.u32 %v967, 7
        %v969 = vsub.s32 1, %v968
        %v970 = vrot.slane %v961, %v969
        %v989 = vunpack.c.l.b16 %v945
        %v990 = vunpack.c.h.b16 %v945
        %v991 = vunpack.c.l.b16 %v946
        %v992 = vunpack.c.h.b16 %v946
        %v993 = vunpack.c.l.b16 %v947
        %v994 = vunpack.c.h.b16 %v947
        %v995 = vunpack.c.l.b16 %v948
        %v996 = vunpack.c.h.b16 %v948
        %v997 = vunpack.c.l.b16 %v949
        %v998 = vunpack.c.h.b16 %v949
        %v999 = vunpack.c.l.b16 %v950
        %v1000 = vunpack.c.h.b16 %v950
        %v1001 = vunpack.c.l.b16 %v951
        %v1002 = vunpack.c.h.b16 %v951
        %v1003 = vunpack.c.l.b16 %v952
        %v1004 = vunpack.c.h.b16 %v952
        %v1005 = vunpack.c.l.b16 %v953
        %v1006 = vunpack.c.h.b16 %v953
        %v1007 = vunpack.c.l.b16 %v954
        %v1008 = vunpack.c.h.b16 %v954
        %v1009 = vunpack.c.l.b16 %v955
        %v1010 = vunpack.c.h.b16 %v955
        %v1011 = vunpack.c.l.b16 %v956
        %v1012 = vunpack.c.h.b16 %v956
        %v1013 = vunpack.c.l.b16 %v957
        %v1014 = vunpack.c.h.b16 %v957
        %v1015 = vunpack.c.l.b16 %v958
        %v1016 = vunpack.c.h.b16 %v958
        %v1017 = vunpack.c.l.b16 %v959
        %v1018 = vunpack.c.h.b16 %v959
        %v1019 = vunpack.c.l.b16 %v960
        %v1020 = vunpack.c.h.b16 %v960
        %v1021 = vpack.c.b16 %v991, %v989
        %v1022 = vpack.c.b16 %v992, %v990
        %v1023 = vpack.c.b16 %v995, %v993
        %v1024 = vpack.c.b16 %v996, %v994
        %v1025 = vpack.c.b16 %v999, %v997
        %v1026 = vpack.c.b16 %v1000, %v998
        %v1027 = vpack.c.b16 %v1003, %v1001
        %v1028 = vpack.c.b16 %v1004, %v1002
        %v1029 = vpack.c.b16 %v1007, %v1005
        %v1030 = vpack.c.b16 %v1008, %v1006
        %v1031 = vpack.c.b16 %v1011, %v1009
        %v1032 = vpack.c.b16 %v1012, %v1010
        %v1033 = vpack.c.b16 %v1015, %v1013
        %v1034 = vpack.c.b16 %v1016, %v1014
        %v1035 = vpack.c.b16 %v1019, %v1017
        %v1036 = vpack.c.b16 %v1020, %v1018
        %1053 = vmatprep.subr.bf16.mxu0 %v1022
        %1054 = vmatpush1.bf16.msra.mxu0 %v1021
        %1055 = vmatprep.subr.bf16.mxu0 %v1024
        %1056 = vmatpush1.bf16.msra.mxu0 %v1023
        %1057 = vmatprep.subr.bf16.mxu0 %v1026
        %1058 = vmatpush1.bf16.msra.mxu0 %v1025
        %1059 = vmatprep.subr.bf16.mxu0 %v1028
        %1060 = vmatpush1.bf16.msra.mxu0 %v1027
        %1061 = vmatprep.subr.bf16.mxu0 %v1030
        %1062 = vmatpush1.bf16.msra.mxu0 %v1029
        %1063 = vmatprep.subr.bf16.mxu0 %v1032
        %1064 = vmatpush1.bf16.msra.mxu0 %v1031
        %1065 = vmatprep.subr.bf16.mxu0 %v1034
        %1066 = vmatpush1.bf16.msra.mxu0 %v1033
        %1067 = vmatprep.subr.bf16.mxu0 %v1036
        %1068 = vmatpush1.bf16.msra.mxu0 %v1035
        %1069 = vmatprep.subr.bf16.mxu0 0
        %1070 = vmatpush1.bf16.msra.mxu0 0
        %1071 = vmatprep.subr.bf16.mxu0 0
        %1072 = vmatpush1.bf16.msra.mxu0 0
        %1073 = vmatprep.subr.bf16.mxu0 0
        %1074 = vmatpush1.bf16.msra.mxu0 0
        %1075 = vmatprep.subr.bf16.mxu0 0
        %1076 = vmatpush1.bf16.msra.mxu0 0
        %1077 = vmatprep.subr.bf16.mxu0 0
        %1078 = vmatpush1.bf16.msra.mxu0 0
        %1079 = vmatprep.subr.bf16.mxu0 0
        %1080 = vmatpush1.bf16.msra.mxu0 0
        %1081 = vmatprep.subr.bf16.mxu0 0
        %1082 = vmatpush1.bf16.msra.mxu0 0
        %1083 = vmatprep.subr.bf16.mxu0 0
        %1084 = vmatpush1.bf16.msra.mxu0 0
        %1085 = vmatprep.mubr.bf16.mxu0 0
        %1086 = vmatmul.mubr.bf16.gmra.mrb[0].mxu0 %v944
        %v1087 = vpop.f32.mrb[0].mxu0
        %v1088 = vadd.f32 %v966, %v1087
        %v1089 = vpop.f32.mrb[0].mxu0
        %v1090 = vadd.f32 %v970, %v1089
        %v1091 = vpop.f32.mrb[0].mxu0
        %v1092 = vadd.f32 %v966, %v1091
        %v1093 = vpop.f32.mrb[0].mxu0
        %v1094 = vadd.f32 %v970, %v1093
        %1095 = vdwg.mxu0
        %v1096 = vmax.f32 %v1088, 0.0
        %v1097 = vmax.f32 %v1090, 0.0
        %v1098 = vmax.f32 %v1092, 0.0
        %v1099 = vmax.f32 %v1094, 0.0
        %v1100 = vpack.c.bf16 %v1098, %v1096
        %v1101 = vpack.c.bf16 %v1099, %v1097
        %v1102 = vld [vmem:[%s6] sm:$0xf]
        %v1103 = vld [vmem:[%s6 + $0x4] sm:$0xf]
        %v1104 = vld [vmem:[%s6 + $0x8] sm:$0xf]
        %v1105 = vld [vmem:[%s6 + $0xc] sm:$0xf]
        %v1106 = vld [vmem:[%s6 + $0x10] sm:$0xf]
        %v1107 = vld [vmem:[%s6 + $0x14] sm:$0xf]
        %v1108 = vld [vmem:[%s6 + $0x18] sm:$0xf]
        %v1109 = vld [vmem:[%s6 + $0x1c] sm:$0xf]
        %v1110 = vld [vmem:[%s6 + $0x20] sm:$0xf]
        %v1111 = vld [vmem:[%s6 + $0x24] sm:$0xf]
        %v1112 = vld [vmem:[%s6 + $0x28] sm:$0xf]
        %v1113 = vld [vmem:[%s6 + $0x2c] sm:$0xf]
        %v1114 = vld [vmem:[%s6 + $0x30] sm:$0xf]
        %v1115 = vld [vmem:[%s6 + $0x34] sm:$0xf]
        %v1116 = vld [vmem:[%s6 + $0x38] sm:$0xf]
        %v1117 = vld [vmem:[%s6 + $0x3c] sm:$0xf]
        %v1118 = vld [vmem:[%s6 + $0x40] sm:$0xf]
        %v1119 = vld [vmem:[%s6 + $0x44] sm:$0xf]
        %v1120 = vld [vmem:[%s6 + $0x48] sm:$0xf]
        %v1121 = vld [vmem:[%s6 + $0x4c] sm:$0xf]
        %v1122 = vld [vmem:[%s6 + $0x50] sm:$0xf]
        %v1123 = vld [vmem:[%s6 + $0x54] sm:$0xf]
        %v1124 = vld [vmem:[%s6 + $0x58] sm:$0xf]
        %v1125 = vld [vmem:[%s6 + $0x5c] sm:$0xf]
        %v1126 = vld [vmem:[%s6 + $0x60] sm:$0xf]
        %v1127 = vld [vmem:[%s6 + $0x64] sm:$0xf]
        %v1128 = vld [vmem:[%s6 + $0x68] sm:$0xf]
        %v1129 = vld [vmem:[%s6 + $0x6c] sm:$0xf]
        %v1130 = vld [vmem:[%s6 + $0x70] sm:$0xf]
        %v1131 = vld [vmem:[%s6 + $0x74] sm:$0xf]
        %v1132 = vld [vmem:[%s6 + $0x78] sm:$0xf]
        %v1133 = vld [vmem:[%s6 + $0x7c] sm:$0xf]
        %v1134 = vld [vmem:[%s7 + $0xb] sm:$0x1]
        %v1136 = vlaneseq
        %v1137 = vshrl.u32 %v1136, 7
        %v1138 = vsub.s32 0, %v1137
        %v1139 = vrot.slane %v1134, %v1138
        %v1173 = vunpack.c.l.b16 %v1102
        %v1174 = vunpack.c.l.b16 %v1103
        %v1175 = vunpack.c.l.b16 %v1104
        %v1176 = vunpack.c.l.b16 %v1105
        %v1177 = vunpack.c.l.b16 %v1106
        %v1178 = vunpack.c.l.b16 %v1107
        %v1179 = vunpack.c.l.b16 %v1108
        %v1180 = vunpack.c.l.b16 %v1109
        %v1181 = vunpack.c.l.b16 %v1110
        %v1182 = vunpack.c.l.b16 %v1111
        %v1183 = vunpack.c.l.b16 %v1112
        %v1184 = vunpack.c.l.b16 %v1113
        %v1185 = vunpack.c.l.b16 %v1114
        %v1186 = vunpack.c.l.b16 %v1115
        %v1187 = vunpack.c.l.b16 %v1116
        %v1188 = vunpack.c.l.b16 %v1117
        %v1189 = vunpack.c.l.b16 %v1118
        %v1190 = vunpack.c.l.b16 %v1119
        %v1191 = vunpack.c.l.b16 %v1120
        %v1192 = vunpack.c.l.b16 %v1121
        %v1193 = vunpack.c.l.b16 %v1122
        %v1194 = vunpack.c.l.b16 %v1123
        %v1195 = vunpack.c.l.b16 %v1124
        %v1196 = vunpack.c.l.b16 %v1125
        %v1197 = vunpack.c.l.b16 %v1126
        %v1198 = vunpack.c.l.b16 %v1127
        %v1199 = vunpack.c.l.b16 %v1128
        %v1200 = vunpack.c.l.b16 %v1129
        %v1201 = vunpack.c.l.b16 %v1130
        %v1202 = vunpack.c.l.b16 %v1131
        %v1203 = vunpack.c.l.b16 %v1132
        %v1204 = vunpack.c.l.b16 %v1133
        %v1205 = vpack.c.b16 %v1174, %v1173
        %v1206 = vpack.c.b16 %v1176, %v1175
        %v1207 = vpack.c.b16 %v1178, %v1177
        %v1208 = vpack.c.b16 %v1180, %v1179
        %v1209 = vpack.c.b16 %v1182, %v1181
        %v1210 = vpack.c.b16 %v1184, %v1183
        %v1211 = vpack.c.b16 %v1186, %v1185
        %v1212 = vpack.c.b16 %v1188, %v1187
        %v1213 = vpack.c.b16 %v1190, %v1189
        %v1214 = vpack.c.b16 %v1192, %v1191
        %v1215 = vpack.c.b16 %v1194, %v1193
        %v1216 = vpack.c.b16 %v1196, %v1195
        %v1217 = vpack.c.b16 %v1198, %v1197
        %v1218 = vpack.c.b16 %v1200, %v1199
        %v1219 = vpack.c.b16 %v1202, %v1201
        %v1220 = vpack.c.b16 %v1204, %v1203
        %1237 = vmatprep.subr.bf16.mxu0 0
        %1238 = vmatpush1.bf16.msra.mxu0 %v1205
        %1239 = vmatprep.subr.bf16.mxu0 0
        %1240 = vmatpush1.bf16.msra.mxu0 %v1206
        %1241 = vmatprep.subr.bf16.mxu0 0
        %1242 = vmatpush1.bf16.msra.mxu0 %v1207
        %1243 = vmatprep.subr.bf16.mxu0 0
        %1244 = vmatpush1.bf16.msra.mxu0 %v1208
        %1245 = vmatprep.subr.bf16.mxu0 0
        %1246 = vmatpush1.bf16.msra.mxu0 %v1209
        %1247 = vmatprep.subr.bf16.mxu0 0
        %1248 = vmatpush1.bf16.msra.mxu0 %v1210
        %1249 = vmatprep.subr.bf16.mxu0 0
        %1250 = vmatpush1.bf16.msra.mxu0 %v1211
        %1251 = vmatprep.subr.bf16.mxu0 0
        %1252 = vmatpush1.bf16.msra.mxu0 %v1212
        %1253 = vmatprep.subr.bf16.mxu0 0
        %1254 = vmatpush1.bf16.msra.mxu0 %v1213
        %1255 = vmatprep.subr.bf16.mxu0 0
        %1256 = vmatpush1.bf16.msra.mxu0 %v1214
        %1257 = vmatprep.subr.bf16.mxu0 0
        %1258 = vmatpush1.bf16.msra.mxu0 %v1215
        %1259 = vmatprep.subr.bf16.mxu0 0
        %1260 = vmatpush1.bf16.msra.mxu0 %v1216
        %1261 = vmatprep.subr.bf16.mxu0 0
        %1262 = vmatpush1.bf16.msra.mxu0 %v1217
        %1263 = vmatprep.subr.bf16.mxu0 0
        %1264 = vmatpush1.bf16.msra.mxu0 %v1218
        %1265 = vmatprep.subr.bf16.mxu0 0
        %1266 = vmatpush1.bf16.msra.mxu0 %v1219
        %1267 = vmatprep.subr.bf16.mxu0 0
        %1268 = vmatpush1.bf16.msra.mxu0 %v1220
        %1269 = vmatprep.mubr.bf16.mxu0 %v1101
        %1270 = vmatmul.mubr.bf16.gmra.mrb[0].mxu0 %v1100
        %v1271 = vpop.f32.mrb[0].mxu0
        %v1272 = vadd.f32 %v1139, %v1271
        %v1273 = vpop.f32.mrb[0].mxu0
        %v1274 = vpop.f32.mrb[0].mxu0
        %v1275 = vadd.f32 %v1139, %v1274
        %v1276 = vpop.f32.mrb[0].mxu0
        %1277 = vdwg.mxu0
        %v1278 = vpack.c.bf16 %v1275, %v1272
        %v1280 = vunpack.c.l.b16 %v1278
        %v1281 = vunpack.c.h.b16 %v1278
        %v1282 = vpack.c.b16 %v1280, %v1280
        %v1283 = vpack.c.b16 %v1281, %v1281
        %vm1286 = vcmask 257024
        %1287 = vst.msk [vmem:[%s390] sm:$0xf] %vm1286, %v1282
        %1288 = vst.msk [vmem:[%s390 + $0x4] sm:$0xf] %vm1286, %v1283
        %s1289 = sand.u32 %s212, 1
        %s1290 = scalar_lea.sflag [#allocation4], %s1289
        %s1291 = sand.u32 %s212, 1
        %s1292 = smul.addr %s1291, 8
        %s1293 = scalar_lea.vmem [#allocation8], %s1292
        %s1294 = sand.u32 %s238, 1
        %s1295 = scalar_lea.sflag [#allocation10], %s1294
        %s1296 = sand.u32 %s238, 1
        %s1297 = smul.addr %s1296, 8
        %s1298 = scalar_lea.vmem [#allocation9], %s1297
        // Predicated region
        $region65: #{tpu_custom_call.1} parent=51 // pred_check
          %p1299 = pneg %p222
        $region66: #{tpu_custom_call.1} parent=51 // pred_check_branch
          %1301 = sbr.rel (%p1299) target = $region68
        $region67: #{tpu_custom_call.1} parent=51 // pred_region
          %s1302 = smul.u32 2, %s31
          %s1304 = ssub.s32 128, 128
          %1305 = vsyncadd %s1290, %s1304
          %s1306 = smul.addr %s1302, 64
          %s1307 = scalar_lea.hbm %s8, %s1306
          %s1308 = sshll.u32 %s1293, 4
          %s1309 = int_to_ptr.vmem [resolvable:$true] %s1308
          %1314 = dma.vmem_to_hbm [thread:$0]  %s1309, 128, %s1307, %s1290, 64, 64, 4
        $region68: #{tpu_custom_call.1} parent=51 // pred_fallthru
          _
        // Predicated region
        $region69: #{tpu_custom_call.1} parent=51 // pred_check
          %p1315 = pneg %p248
        $region70: #{tpu_custom_call.1} parent=51 // pred_check_branch
          %1317 = sbr.rel (%p1315) target = $region72
        $region71: #{tpu_custom_call.1} parent=51 // pred_region
          %s1318 = smul.u32 2, %s31
          %s1320 = ssub.s32 128, 128
          %1321 = vsyncadd %s1295, %s1320
          %s1322 = smul.addr %s1318, 64
          %s1323 = scalar_lea.hbm %s9, %s1322
          %s1324 = sshll.u32 %s1298, 4
          %s1325 = int_to_ptr.vmem [resolvable:$true] %s1324
          %1330 = dma.vmem_to_hbm [thread:$0]  %s1325, 128, %s1323, %s1295, 64, 64, 4
        $region72: #{tpu_custom_call.1} parent=51 // pred_fallthru
          _
      $region52: #{tpu_custom_call.1} parent=5 // pred_fallthru
        _
      %p1331 = scmp.le.s32.totalorder 2, %s26
      // Predicated region
      $region73: #{tpu_custom_call.1} parent=5 // pred_check
        %p1332 = pneg %p1331
      $region74: #{tpu_custom_call.1} parent=5 // pred_check_branch
        %1334 = sbr.rel (%p1332) target = $region76
      $region75: #{tpu_custom_call.1} parent=5 // pred_region
        %s1335 = ssub.s32 %s26, 2
        // Predicated region
        $region77: #{tpu_custom_call.1} parent=75 // pred_check
          %p1336 = pneg %p228
        $region78: #{tpu_custom_call.1} parent=75 // pred_check_branch
          %1338 = sbr.rel (%p1336) target = $region80
        $region79: #{tpu_custom_call.1} parent=75 // pred_region
          %s1339 = sand.u32 %s213, 1
          %s1340 = scalar_lea.sflag [#allocation4], %s1339
          %s1341 = sand.u32 %s213, 1
          %s1342 = smul.addr %s1341, 8
          %s1343 = scalar_lea.vmem [#allocation8], %s1342
          %1344 = dma.done %s1340, 128
        $region80: #{tpu_custom_call.1} parent=75 // pred_fallthru
          _
        // Predicated region
        $region81: #{tpu_custom_call.1} parent=75 // pred_check
          %p1345 = pneg %p254
        $region82: #{tpu_custom_call.1} parent=75 // pred_check_branch
          %1347 = sbr.rel (%p1345) target = $region84
        $region83: #{tpu_custom_call.1} parent=75 // pred_region
          %s1348 = sand.u32 %s239, 1
          %s1349 = scalar_lea.sflag [#allocation10], %s1348
          %s1350 = sand.u32 %s239, 1
          %s1351 = smul.addr %s1350, 8
          %s1352 = scalar_lea.vmem [#allocation9], %s1351
          %1353 = dma.done %s1349, 128
        $region84: #{tpu_custom_call.1} parent=75 // pred_fallthru
          _
      $region76: #{tpu_custom_call.1} parent=5 // pred_fallthru
        _
    $region6: #{tpu_custom_call.1} parent=1 // loop_footer
      %s30 = sadd.s32 1, %s26
    $region7: #{tpu_custom_call.1} parent=1 // loop_footer_branch
      %25 = sbr.rel target = $region3
    $region8: #{tpu_custom_call.1} parent=1 // loop_exit
      _
    %1354 = vsyncpa [#allocation3], 1
    %s1355 = scalar_lea.sflag [#allocation3], 1
    %1356 = vsyncpa %s1355, 1
    %1357 = vsyncpa [#allocation6], 1
    %1358 = vsyncpa [#allocation4], 1
    %s1359 = scalar_lea.sflag [#allocation4], 1
    %1360 = vsyncpa %s1359, 1
    %1361 = vsyncpa [#allocation10], 1
    %s1362 = scalar_lea.sflag [#allocation10], 1
    %1363 = vsyncpa %s1362, 1

</llo_original>
